<compile_context>
chip_gen: v6e
topology: v6e:2x2x1
jax: 0.10.0
libtpu: 0.0.40
codegen_flags: <defaults>
</compile_context>

<pallas_src>
import functools

import jax
import jax.numpy as jnp
from jax.experimental import pallas as pl
from jax.experimental.pallas import tpu as pltpu


def _hashconv_kernel(patches_ref, wk_ref, wv_ref, out_ref, *, inv_t, n_out):
    # patches_ref: (KKC, tm)        -- taps on sublanes, pixels on lanes
    # wk_ref:      (n_keys, KKC)    -- key conv weights as a matmul operand
    # wv_ref:      (Cout, n_keys)   -- 1x1 value conv weights
    # out_ref:     (Cout + 1, tm)   -- rows [0:Cout] = value conv, row Cout = entropy
    # key conv as one MXU matmul over the im2col taps; f32 accumulation.
    sims = jnp.dot(wk_ref[...], patches_ref[...],
                   preferred_element_type=jnp.float32)          # (n_keys, tm)
    z = sims * inv_t
    z = z - jnp.max(z, axis=0, keepdims=True)                   # stable softmax
    p = jnp.exp(z)                                              # (n_keys, tm)
    denom = jnp.sum(p, axis=0, keepdims=True)                   # (1, tm)
    inv_denom = pl.reciprocal(denom, approx=True)               # EUP vrcp
    attn = p * inv_denom                                        # (n_keys, tm) f32
    # per-pixel entropy via log-sum-exp identity (one log per pixel, NaN-free)
    ent = jnp.log(denom) - jnp.sum(p * z, axis=0, keepdims=True) * inv_denom  # (1, tm)
    # 1x1 value conv == matmul over the key axis (MXU)
    val = jnp.dot(wv_ref[...], attn.astype(wv_ref.dtype),
                  preferred_element_type=jnp.float32)           # (Cout, tm)
    out_ref[pl.ds(0, n_out), :] = val.astype(out_ref.dtype)
    out_ref[pl.ds(n_out, 1), :] = ent.astype(out_ref.dtype)


def _round_up(a, b):
    return (a + b - 1) // b * b


def hash_conv_forward(x, wk, wv, *, t=1.0, tm_max=2048, use_bf16=True):
    """x:  (N, Cin, H, W)  float32 (NCHW, like PyTorch).
    wk: (n_keys, Cin, KH, KW)   Conv2d weight, OIHW, no bias.
    wv: (Cout, n_keys, 1, 1)    Conv2d weight, OIHW, no bias.
    Returns (out (N, Cout, H, W), avg_entropy scalar)."""
    N, Cin, H, W = x.shape
    n_keys, _, KH, KW = wk.shape
    Cout = wv.shape[0]
    pad_h, pad_w = (KH - 1) // 2, (KW - 1) // 2   # padding=(1,1) for 3x3

    M = N * H * W
    KKC = KH * KW * Cin

    # Tile choice: as large as reasonable for pipeline efficiency, but keep the
    # grid >= 2 steps when M allows (v7x has 2 TensorCores per chip).
    tm = min(tm_max, max(128, _round_up(-(-M // 2), 128)))
    M_pad = _round_up(M, tm)
    grid = M_pad // tm

    # ---- glue: transposed im2col (KKC, M): taps on sublanes, pixels on lanes ----
    xp = jnp.pad(x, ((0, 0), (0, 0), (pad_h, pad_h), (pad_w, pad_w)))
    xt = jnp.transpose(xp, (1, 0, 2, 3))                       # (Cin, N, H+2p, W+2p)
    taps = []
    for dy in range(KH):
        for dx in range(KW):
            taps.append(xt[:, :, dy:dy + H, dx:dx + W].reshape(Cin, M))
    patches_t = jnp.concatenate(taps, axis=0)                  # row = (dy*KW+dx)*Cin + c
    if M_pad != M:
        patches_t = jnp.pad(patches_t, ((0, 0), (0, M_pad - M)))

    # weights as matmul operands, matching the (dy, dx, c) tap ordering
    wk_t = jnp.transpose(wk, (0, 2, 3, 1)).reshape(n_keys, KKC)  # (n_keys, KKC)
    wv_t = wv[:, :, 0, 0]                                        # (Cout, n_keys)

    cdt = jnp.bfloat16 if use_bf16 else jnp.float32
    patches_t = patches_t.astype(cdt)
    wk_t = wk_t.astype(cdt)
    wv_t = wv_t.astype(cdt)

    kernel = functools.partial(_hashconv_kernel, inv_t=1.0 / t, n_out=Cout)

    slab = pl.pallas_call(
        kernel,
        out_shape=jax.ShapeDtypeStruct((Cout + 1, M_pad), jnp.float32),
        grid_spec=pltpu.PrefetchScalarGridSpec(
            num_scalar_prefetch=0,
            grid=(grid,),
            in_specs=[
                pl.BlockSpec((KKC, tm), lambda i: (0, i)),
                pl.BlockSpec((n_keys, KKC), lambda i: (0, 0)),
                pl.BlockSpec((Cout, n_keys), lambda i: (0, 0)),
            ],
            out_specs=pl.BlockSpec((Cout + 1, tm), lambda i: (0, i)),
        ),
        compiler_params=pltpu.CompilerParams(
            dimension_semantics=("parallel",)),
    )(patches_t, wk_t, wv_t)

    out = (slab[:Cout, :M]
           .reshape(Cout, N, H, W)
           .transpose(1, 0, 2, 3)
           .astype(x.dtype))                                   # back to NCHW
    avg_entropy = jnp.mean(slab[Cout, :M])
    return out, avg_entropy


def _reference(x, wk, wv, t):
    """Pure-JAX reference mirroring the PyTorch forward (soft path)."""
    sims = jax.lax.conv_general_dilated(
        x, wk, window_strides=(1, 1), padding=((1, 1), (1, 1)),
        dimension_numbers=("NCHW", "OIHW", "NCHW"))
    attn = jax.nn.softmax(sims / t, axis=1)
    ent = jnp.mean(-jnp.sum(attn * jnp.log(attn), axis=1))
    out = jax.lax.conv_general_dilated(
        attn, wv, window_strides=(1, 1), padding=((0, 0), (0, 0)),
        dimension_numbers=("NCHW", "OIHW", "NCHW"))
    return out, ent


if __name__ == "__main__":
    # small shapes consistent with the module
    N, Cin, H, W = 2, 4, 16, 16
    n_keys, Cout, K = 32, 8, 3
    temperature = 1.0

    key = jax.random.PRNGKey(0)
    kx, kk, kv = jax.random.split(key, 3)
    x = jax.random.normal(kx, (N, Cin, H, W), dtype=jnp.float32)
    # deterministic parameter init (shapes from nn.Conv2d in __init__)
    wk = jax.random.normal(kk, (n_keys, Cin, K, K), dtype=jnp.float32) * 0.1
    wv = jax.random.normal(kv, (Cout, n_keys, 1, 1), dtype=jnp.float32) * 0.1

    out, avg_entropy = hash_conv_forward(x, wk, wv, t=temperature)
    out = jax.block_until_ready(out)
    avg_entropy = jax.block_until_ready(avg_entropy)

    ref_out, ref_ent = _reference(x, wk, wv, temperature)
    assert out.shape == (N, Cout, H, W)
    assert jnp.allclose(out, ref_out, atol=1e-2, rtol=1e-2)
    assert jnp.allclose(avg_entropy, ref_ent, atol=1e-2, rtol=1e-2)

    print("KERNEL_OK")
</pallas_src>

<mosaic_0001>
module attributes {stable_mosaic.version = 11 : i64} {
  func.func @_hashconv_kernel(%arg0: i32, %arg1: memref<36x256xbf16, #tpu.memory_space<vmem>>, %arg2: memref<32x36xbf16, #tpu.memory_space<vmem>>, %arg3: memref<8x32xbf16, #tpu.memory_space<vmem>>, %arg4: memref<9x256xf32, #tpu.memory_space<vmem>>) attributes {dimension_semantics = [#tpu.dimension_semantics<parallel>], iteration_bounds = array<i64: 2>, scalar_prefetch = 0 : i64, scratch_operands = 0 : i64, tpu.core_type = #tpu.core_type<tc>, window_params = [{transform_indices = @transform_0, window_bounds = array<i64: 36, 256>}, {pipeline_mode = #tpu.pipeline_mode<synchronous>, transform_indices = @transform_1, window_bounds = array<i64: 32, 36>}, {pipeline_mode = #tpu.pipeline_mode<synchronous>, transform_indices = @transform_2, window_bounds = array<i64: 8, 32>}, {transform_indices = @transform_3, window_bounds = array<i64: 9, 256>}]} {
    %c0 = arith.constant 0 : index
    %c0_0 = arith.constant 0 : index
    %0 = vector.load %arg2[%c0, %c0_0] : memref<32x36xbf16, #tpu.memory_space<vmem>>, vector<32x36xbf16>
    %c0_1 = arith.constant 0 : index
    %c0_2 = arith.constant 0 : index
    %1 = vector.load %arg1[%c0_1, %c0_2] : memref<36x256xbf16, #tpu.memory_space<vmem>>, vector<36x256xbf16>
    %cst = arith.constant dense<0.000000e+00> : vector<32x256xf32>
    %2 = tpu.matmul %0, %1, %cst {dimension_numbers = #tpu.dot_dimension_numbers<[1], [0], [0], [1], [0, 0, 1, 1], [], []>} : vector<32x36xbf16>, vector<36x256xbf16>, vector<32x256xf32> -> vector<32x256xf32>
    %cst_3 = arith.constant 1.000000e+00 : f32
    %3 = vector.broadcast %cst_3 : f32 to vector<32x256xf32>
    %4 = arith.mulf %2, %3 : vector<32x256xf32>
    %cst_4 = arith.constant dense<0xFF800000> : vector<256xf32>
    %5 = vector.multi_reduction <maximumf>, %4, %cst_4 [0] : vector<32x256xf32> to vector<256xf32>
    %6 = vector.shape_cast %5 : vector<256xf32> to vector<1x256xf32>
    %7 = vector.broadcast %6 : vector<1x256xf32> to vector<32x256xf32>
    %8 = arith.subf %4, %7 : vector<32x256xf32>
    %9 = math.exp %8 : vector<32x256xf32>
    %cst_5 = arith.constant dense<0.000000e+00> : vector<256xf32>
    %10 = vector.multi_reduction <add>, %9, %cst_5 [0] : vector<32x256xf32> to vector<256xf32>
    %11 = vector.shape_cast %10 : vector<256xf32> to vector<1x256xf32>
    %12 = tpu.reciprocal %11 {approx = true} : vector<1x256xf32> -> vector<1x256xf32>
    %13 = vector.broadcast %12 : vector<1x256xf32> to vector<32x256xf32>
    %14 = arith.mulf %9, %13 : vector<32x256xf32>
    %15 = math.log %11 : vector<1x256xf32>
    %16 = arith.mulf %9, %8 : vector<32x256xf32>
    %cst_6 = arith.constant dense<0.000000e+00> : vector<256xf32>
    %17 = vector.multi_reduction <add>, %16, %cst_6 [0] : vector<32x256xf32> to vector<256xf32>
    %18 = vector.shape_cast %17 : vector<256xf32> to vector<1x256xf32>
    %19 = arith.mulf %18, %12 : vector<1x256xf32>
    %20 = arith.subf %15, %19 : vector<1x256xf32>
    %c0_7 = arith.constant 0 : index
    %c0_8 = arith.constant 0 : index
    %21 = vector.load %arg3[%c0_7, %c0_8] : memref<8x32xbf16, #tpu.memory_space<vmem>>, vector<8x32xbf16>
    %22 = arith.truncf %14 : vector<32x256xf32> to vector<32x256xbf16>
    %cst_9 = arith.constant dense<0.000000e+00> : vector<8x256xf32>
    %23 = tpu.matmul %21, %22, %cst_9 {dimension_numbers = #tpu.dot_dimension_numbers<[1], [0], [0], [1], [0, 0, 1, 1], [], []>} : vector<8x32xbf16>, vector<32x256xbf16>, vector<8x256xf32> -> vector<8x256xf32>
    %c0_10 = arith.constant 0 : index
    %c0_11 = arith.constant 0 : index
    %24 = vector.load %arg4[%c0_10, %c0_11] : memref<9x256xf32, #tpu.memory_space<vmem>>, vector<8x256xf32>
    tpu.vector_store %arg4[%c0_10, %c0_11], %23 {strides = array<i32>} : memref<9x256xf32, #tpu.memory_space<vmem>>, vector<8x256xf32>,
    %c8 = arith.constant 8 : index
    %c0_12 = arith.constant 0 : index
    %25 = vector.load %arg4[%c8, %c0_12] : memref<9x256xf32, #tpu.memory_space<vmem>>, vector<1x256xf32>
    tpu.vector_store %arg4[%c8, %c0_12], %20 {strides = array<i32>} : memref<9x256xf32, #tpu.memory_space<vmem>>, vector<1x256xf32>,
    return
  }
  func.func @transform_0(%arg0: i32) -> (i32, i32) {
    %c0_i32 = arith.constant 0 : i32
    %c0_i32_0 = arith.constant 0 : i32
    return %c0_i32, %arg0 : i32, i32
  }
  func.func @transform_1(%arg0: i32) -> (i32, i32) {
    %c0_i32 = arith.constant 0 : i32
    %c0_i32_0 = arith.constant 0 : i32
    %c0_i32_1 = arith.constant 0 : i32
    return %c0_i32, %c0_i32_0 : i32, i32
  }
  func.func @transform_2(%arg0: i32) -> (i32, i32) {
    %c0_i32 = arith.constant 0 : i32
    %c0_i32_0 = arith.constant 0 : i32
    %c0_i32_1 = arith.constant 0 : i32
    return %c0_i32, %c0_i32_0 : i32, i32
  }
  func.func @transform_3(%arg0: i32) -> (i32, i32) {
    %c0_i32 = arith.constant 0 : i32
    %c0_i32_0 = arith.constant 0 : i32
    return %c0_i32, %arg0 : i32, i32
  }
}

</mosaic_0001>

<llo_original>
// kernel: tpu_custom_call.1
$region0: #{tpu_custom_call.1}
  #allocation0 [shape = 'u32[]', space=smem, size = 0x4, offset = 0x4, fixed_abs, tag = 'smem constant byte address 0x4 - core index']
  #allocation1 [shape = 'u32[144,128]{1,0:T(1,128)}', space=vmem, size = 0x12000, scoped, tag = 'internal scratch']
  %s0 = inlined_call_operand.hbm [shape: bf16[36,512], index: 0, kind: input, shape index: {}]
  %s1 = inlined_call_operand.hbm [shape: bf16[32,36], index: 1, kind: input, shape index: {}]
  %s2 = inlined_call_operand.hbm [shape: bf16[8,32], index: 2, kind: input, shape index: {}]
  %s3 = inlined_call_operand.hbm [shape: f32[9,512], index: 3, kind: output, shape index: {}]
  %s4 = sld [smem:[#allocation0]]
  $region57: #{tpu_custom_call.1} parent=0
    _
  %s6 = ssub.s32 1, %s4
  %s7 = scalar_select 0, %s6, %s4
  $region1: #{tpu_custom_call.1} parent=0
    #allocation2 [shape = 'u8[40960]{0}', space=vmem, size = 0xa000, scoped, tag = 'input window, operand 0']
    #allocation3 [shape = 's32[2]{0}', space=sflag, size = 0x8, scoped, tag = 'scoped memory for tpu_custom_call.1']
    #allocation4 [shape = 's32[2]{0}', space=sflag, size = 0x8, scoped, tag = 'scoped memory for tpu_custom_call.1']
    #allocation5 [shape = 'u8[8192]{0}', space=vmem, size = 0x2000, scoped, tag = 'input window, operand 1, single buffered']
    #allocation6 [shape = 's32[1]{0}', space=sflag, size = 0x4, scoped, tag = 'scoped memory for tpu_custom_call.1']
    #allocation7 [shape = 'u8[2048]{0}', space=vmem, size = 0x800, scoped, tag = 'input window, operand 2, single buffered']
    #allocation8 [shape = 'u8[32768]{0}', space=vmem, size = 0x8000, scoped, tag = 'output window, operand 0']
    %8 = vsyncpa [#allocation3], 0
    %s9 = scalar_lea.sflag [#allocation3], 1
    %10 = vsyncpa %s9, 0
    %11 = vsyncpa [#allocation6], 0
    %12 = vsyncpa [#allocation4], 0
    %s13 = scalar_lea.sflag [#allocation4], 1
    %14 = vsyncpa %s13, 0
    loop: start=0, step=1, limit=4
    $region2: #{tpu_custom_call.1} parent=1 // loop_pre_header
      _
    $region3: #{tpu_custom_call.1} parent=1 // loop_header
      %s16 = sphi 0, %s20
      %p17 = scmp.ge.s32.totalorder %s16, 4
      %s26 = sphi 0, %s28
      %s29 = sphi 0, %s26
      %s30 = sphi 0, %s29
      %s46 = sphi 0, %s30
      %s50 = sphi 0, %s50
      %s52 = sphi 0, %s50
      %s53 = sphi 0, %s52
      %s67 = sphi 0, %s53
      %s71 = sphi 0, %s71
      %s73 = sphi 0, %s71
      %s74 = sphi 0, %s73
      %s88 = sphi 0, %s74
      %s94 = sphi 0, %s96
      %s97 = sphi 0, %s94
      %s98 = sphi 0, %s97
      %s114 = sphi 0, %s98
    $region4: #{tpu_custom_call.1} parent=1 // loop_header_branch
      %19 = sbr.rel (%p17) target = $region8
    $region5: #{tpu_custom_call.1} parent=1 // loop_body
      %s21 = ssub.s32 %s16, 1
      %s22 = ssub.s32 %s16, 2
      %s23 = sadd.s32 %s16, 1
      %s24 = ssub.s32 %s16, %s23
      %p25 = scmp.eq.s32.totalorder %s24, 0
      %s27 = sadd.s32 %s26, 1
      %s28 = scalar_select %p25, %s26, %s27
      %p31 = pneg %p25
      %p32 = scmp.eq.s32.totalorder %s16, 1
      %p33 = por %p31, %p32
      %p34 = scmp.ne.s32.totalorder %s26, %s29
      %p35 = scmp.eq.s32.totalorder %s16, 0
      %p36 = por %p34, %p35
      %p37 = scmp.ne.s32.totalorder %s26, %s29
      %p38 = scmp.eq.s32.totalorder %s21, 1
      %p39 = por %p37, %p38
      %p40 = scmp.ne.s32.totalorder %s29, %s30
      %p41 = scmp.eq.s32.totalorder %s21, 0
      %p42 = por %p40, %p41
      %p43 = scmp.ne.s32.totalorder %s29, %s30
      %p44 = scmp.eq.s32.totalorder %s22, 1
      %p45 = por %p43, %p44
      %p47 = scmp.ne.s32.totalorder %s30, %s46
      %p48 = scmp.eq.s32.totalorder %s22, 0
      %p49 = por %p47, %p48
      %s51 = sadd.s32 %s50, 1
      %p54 = scmp.eq.s32.totalorder %s16, 1
      %p55 = scmp.ne.s32.totalorder %s50, %s52
      %p56 = scmp.eq.s32.totalorder %s16, 0
      %p57 = por %p55, %p56
      %p58 = scmp.ne.s32.totalorder %s50, %s52
      %p59 = scmp.eq.s32.totalorder %s21, 1
      %p60 = por %p58, %p59
      %p61 = scmp.ne.s32.totalorder %s52, %s53
      %p62 = scmp.eq.s32.totalorder %s21, 0
      %p63 = por %p61, %p62
      %p64 = scmp.ne.s32.totalorder %s52, %s53
      %p65 = scmp.eq.s32.totalorder %s22, 1
      %p66 = por %p64, %p65
      %p68 = scmp.ne.s32.totalorder %s53, %s67
      %p69 = scmp.eq.s32.totalorder %s22, 0
      %p70 = por %p68, %p69
      %s72 = sadd.s32 %s71, 1
      %p75 = scmp.eq.s32.totalorder %s16, 1
      %p76 = scmp.ne.s32.totalorder %s71, %s73
      %p77 = scmp.eq.s32.totalorder %s16, 0
      %p78 = por %p76, %p77
      %p79 = scmp.ne.s32.totalorder %s71, %s73
      %p80 = scmp.eq.s32.totalorder %s21, 1
      %p81 = por %p79, %p80
      %p82 = scmp.ne.s32.totalorder %s73, %s74
      %p83 = scmp.eq.s32.totalorder %s21, 0
      %p84 = por %p82, %p83
      %p85 = scmp.ne.s32.totalorder %s73, %s74
      %p86 = scmp.eq.s32.totalorder %s22, 1
      %p87 = por %p85, %p86
      %p89 = scmp.ne.s32.totalorder %s74, %s88
      %p90 = scmp.eq.s32.totalorder %s22, 0
      %p91 = por %p89, %p90
      %s92 = ssub.s32 %s16, %s23
      %p93 = scmp.eq.s32.totalorder %s92, 0
      %s95 = sadd.s32 %s94, 1
      %s96 = scalar_select %p93, %s94, %s95
      %p99 = pneg %p93
      %p100 = scmp.eq.s32.totalorder %s16, 1
      %p101 = por %p99, %p100
      %p102 = scmp.ne.s32.totalorder %s94, %s97
      %p103 = scmp.eq.s32.totalorder %s16, 0
      %p104 = por %p102, %p103
      %p105 = scmp.ne.s32.totalorder %s94, %s97
      %p106 = scmp.eq.s32.totalorder %s21, 1
      %p107 = por %p105, %p106
      %p108 = scmp.ne.s32.totalorder %s97, %s98
      %p109 = scmp.eq.s32.totalorder %s21, 0
      %p110 = por %p108, %p109
      %p111 = scmp.ne.s32.totalorder %s97, %s98
      %p112 = scmp.eq.s32.totalorder %s22, 1
      %p113 = por %p111, %p112
      %p115 = scmp.ne.s32.totalorder %s98, %s114
      %p116 = scmp.eq.s32.totalorder %s22, 0
      %p117 = por %p115, %p116
      %p118 = scmp.le.s32.totalorder 1, %s16
      %p119 = scmp.lt.s32.totalorder %s16, 3
      %p120 = pnand %p118, %p119
      %p121 = pneg %p120
      // Predicated region
      $region9: #{tpu_custom_call.1} parent=5 // pred_check
        _
      $region10: #{tpu_custom_call.1} parent=5 // pred_check_branch
        %123 = sbr.rel (%p120) target = $region12
      $region11: #{tpu_custom_call.1} parent=5 // pred_region
        %s124 = ssub.s32 %s16, 1
        // Predicated region
        $region13: #{tpu_custom_call.1} parent=11 // pred_check
          %p125 = pneg %p63
        $region14: #{tpu_custom_call.1} parent=11 // pred_check_branch
          %127 = sbr.rel (%p125) target = $region16
        $region15: #{tpu_custom_call.1} parent=11 // pred_region
          %s129 = ssub.s32 256, 256
          %130 = vsyncadd [#allocation6], %s129
          %s131 = sshll.u32 [#allocation5], 4
          %s132 = int_to_ptr.vmem [resolvable:$true] %s131
          %137 = dma.hbm_to_vmem [thread:$0]  %s1, 256, %s132, [#allocation6], 64, 64, 4
        $region16: #{tpu_custom_call.1} parent=11 // pred_fallthru
          _
        // Predicated region
        $region17: #{tpu_custom_call.1} parent=11 // pred_check
          %p138 = pneg %p84
        $region18: #{tpu_custom_call.1} parent=11 // pred_check_branch
          %140 = sbr.rel (%p138) target = $region20
        $region19: #{tpu_custom_call.1} parent=11 // pred_region
          %s142 = ssub.s32 64, 64
          %143 = vsyncadd [#allocation6], %s142
          %s145 = sshll.u32 [#allocation7], 4
          %s146 = int_to_ptr.vmem [resolvable:$true] %s145
          %148 = dma.hbm_to_vmem [thread:$0]  %s2, 64, %s146, [#allocation6]
        $region20: #{tpu_custom_call.1} parent=11 // pred_fallthru
          _
      $region12: #{tpu_custom_call.1} parent=5 // pred_fallthru
        _
      %p149 = scmp.lt.s32.totalorder %s16, 2
      // Predicated region
      $region21: #{tpu_custom_call.1} parent=5 // pred_check
        %p150 = pneg %p149
      $region22: #{tpu_custom_call.1} parent=5 // pred_check_branch
        %152 = sbr.rel (%p150) target = $region24
      $region23: #{tpu_custom_call.1} parent=5 // pred_region
        // Predicated region
        $region25: #{tpu_custom_call.1} parent=23 // pred_check
          %p153 = pneg %p36
        $region26: #{tpu_custom_call.1} parent=23 // pred_check_branch
          %155 = sbr.rel (%p153) target = $region28
        $region27: #{tpu_custom_call.1} parent=23 // pred_region
          %s156 = sand.u32 %s26, 1
          %s157 = scalar_lea.sflag [#allocation3], %s156
          %s158 = sand.u32 %s26, 1
          %s159 = smul.addr %s158, 40
          %s160 = scalar_lea.vmem [#allocation2], %s159
          %s161 = smul.u32 2, %s16
          %s163 = ssub.s32 640, 640
          %164 = vsyncadd %s157, %s163
          %s165 = smul.addr %s161, 64
          %s166 = scalar_lea.hbm %s0, %s165
          %s167 = sshll.u32 %s160, 4
          %s168 = int_to_ptr.vmem [resolvable:$true] %s167
          %173 = dma.hbm_to_vmem [thread:$0]  %s166, 640, %s168, %s157, 256, 128, 8
        $region28: #{tpu_custom_call.1} parent=23 // pred_fallthru
          _
      $region24: #{tpu_custom_call.1} parent=5 // pred_fallthru
        _
      %p174 = scmp.le.s32.totalorder 1, %s16
      %p175 = scmp.lt.s32.totalorder %s16, 3
      %p176 = pnand %p174, %p175
      %p177 = pneg %p176
      // Predicated region
      $region29: #{tpu_custom_call.1} parent=5 // pred_check
        _
      $region30: #{tpu_custom_call.1} parent=5 // pred_check_branch
        %179 = sbr.rel (%p176) target = $region32
      $region31: #{tpu_custom_call.1} parent=5 // pred_region
        %s180 = ssub.s32 %s16, 1
        %s181 = sand.u32 %s29, 1
        %s182 = scalar_lea.sflag [#allocation3], %s181
        %s183 = sand.u32 %s29, 1
        %s184 = smul.addr %s183, 40
        %s185 = scalar_lea.vmem [#allocation2], %s184
        // Predicated region
        $region33: #{tpu_custom_call.1} parent=31 // pred_check
          %p186 = pneg %p42
        $region34: #{tpu_custom_call.1} parent=31 // pred_check_branch
          %188 = sbr.rel (%p186) target = $region36
        $region35: #{tpu_custom_call.1} parent=31 // pred_region
          %189 = dma.done %s182, 640
        $region36: #{tpu_custom_call.1} parent=31 // pred_fallthru
          _
        // Predicated region
        $region37: #{tpu_custom_call.1} parent=31 // pred_check
          %p190 = pneg %p63
        $region38: #{tpu_custom_call.1} parent=31 // pred_check_branch
          %192 = sbr.rel (%p190) target = $region40
        $region39: #{tpu_custom_call.1} parent=31 // pred_region
          %193 = dma.done [#allocation6], 256
        $region40: #{tpu_custom_call.1} parent=31 // pred_fallthru
          _
        // Predicated region
        $region41: #{tpu_custom_call.1} parent=31 // pred_check
          %p194 = pneg %p84
        $region42: #{tpu_custom_call.1} parent=31 // pred_check_branch
          %196 = sbr.rel (%p194) target = $region44
        $region43: #{tpu_custom_call.1} parent=31 // pred_region
          %197 = dma.done [#allocation6], 64
        $region44: #{tpu_custom_call.1} parent=31 // pred_fallthru
          _
        %s198 = sand.u32 %s29, 1
        %s199 = scalar_lea.sflag [#allocation3], %s198
        %s200 = sand.u32 %s29, 1
        %s201 = smul.addr %s200, 40
        %s202 = scalar_lea.vmem [#allocation2], %s201
        %p203 = pneg %p42
        %p204 = pneg %p39
        %p205 = pneg %p63
        %p206 = pneg %p60
        %p207 = pneg %p84
        %p208 = pneg %p81
        %p209 = pneg %p110
        %p210 = pneg %p107
        %s211 = sand.u32 %s97, 1
        %s212 = scalar_lea.sflag [#allocation4], %s211
        %s213 = sand.u32 %s97, 1
        %s214 = smul.addr %s213, 32
        %s215 = scalar_lea.vmem [#allocation8], %s214
        %s216 = smul.u32 2, %s21
        %s217 = smul.u32 2, %s21
        %v219 = vld [vmem:[#allocation5] sm:$0xf]
        %v220 = vld [vmem:[#allocation5 + $0x4] sm:$0xf]
        %v221 = vld [vmem:[#allocation5 + $0x8] sm:$0xf]
        %v222 = vld [vmem:[#allocation5 + $0xc] sm:$0xf]
        %v223 = vld [vmem:[%s185] sm:$0xff]
        %v224 = vld [vmem:[%s185 + $0x8] sm:$0xff]
        %v225 = vld [vmem:[%s185 + $0x10] sm:$0xff]
        %v226 = vld [vmem:[%s185 + $0x18] sm:$0xff]
        %v227 = vld [vmem:[%s185 + $0x20] sm:$0x33]
        %v232 = vunpack.c.l.b16 %v219
        %v233 = vunpack.c.l.b16 %v220
        %v234 = vunpack.c.l.b16 %v221
        %v235 = vunpack.c.l.b16 %v222
        %v236 = vpack.c.b16 %v233, %v232
        %v237 = vpack.c.b16 %v235, %v234
        %v243 = vunpack.c.l.b16 %v223
        %v244 = vunpack.c.h.b16 %v223
        %v245 = vunpack.c.l.b16 %v224
        %v246 = vunpack.c.h.b16 %v224
        %v247 = vunpack.c.l.b16 %v225
        %v248 = vunpack.c.h.b16 %v225
        %v249 = vunpack.c.l.b16 %v226
        %v250 = vunpack.c.h.b16 %v226
        %v251 = vunpack.c.l.b16 %v227
        %v252 = vunpack.c.h.b16 %v227
        %v253 = vpack.c.b16 %v245, %v243
        %v254 = vpack.c.b16 %v246, %v244
        %v255 = vpack.c.b16 %v249, %v247
        %v256 = vpack.c.b16 %v250, %v248
        %v257 = vpack.c.b16 %v251, %v251
        %v258 = vpack.c.b16 %v252, %v252
        %vm263 = vcmask 293888
        %v265 = vsel %vm263, %v236, 0
        %v268 = vsel %vm263, %v237, 0
        %vm270 = vcmask 1041408
        %v272 = vsel %vm270, %v257, 0
        %v275 = vsel %vm270, %v258, 0
        %277 = vmatprep.subr.bf16.mxu0 0
        %278 = vmatpush1.bf16.msra.mxu0 0
        %279 = vmatprep.subr.bf16.mxu0 0
        %280 = vmatpush1.bf16.msra.mxu0 0
        %281 = vmatprep.subr.bf16.mxu0 0
        %282 = vmatpush1.bf16.msra.mxu0 0
        %283 = vmatprep.subr.bf16.mxu0 0
        %284 = vmatpush1.bf16.msra.mxu0 0
        %285 = vmatprep.subr.bf16.mxu0 0
        %286 = vmatpush1.bf16.msra.mxu0 0
        %287 = vmatprep.subr.bf16.mxu0 %v275
        %288 = vmatpush1.bf16.msra.mxu0 %v272
        %289 = vmatprep.subr.bf16.mxu0 %v256
        %290 = vmatpush1.bf16.msra.mxu0 %v255
        %291 = vmatprep.subr.bf16.mxu0 %v254
        %292 = vmatpush1.bf16.msra.mxu0 %v253
        %293 = vmatprep.subr.bf16.mxu0 0
        %294 = vmatpush2.bf16.msra.mxu0 0
        %295 = vmatprep.subr.bf16.mxu0 0
        %296 = vmatpush2.bf16.msra.mxu0 0
        %297 = vmatprep.subr.bf16.mxu0 0
        %298 = vmatpush2.bf16.msra.mxu0 0
        %299 = vmatprep.subr.bf16.mxu0 0
        %300 = vmatpush2.bf16.msra.mxu0 0
        %301 = vmatprep.subr.bf16.mxu0 0
        %302 = vmatpush2.bf16.msra.mxu0 0
        %303 = vmatprep.subr.bf16.mxu0 0
        %304 = vmatpush2.bf16.msra.mxu0 0
        %305 = vmatprep.subr.bf16.mxu0 0
        %306 = vmatpush2.bf16.msra.mxu0 0
        %307 = vmatprep.subr.bf16.mxu0 0
        %308 = vmatpush2.bf16.msra.mxu0 0
        %309 = vmatprep.mubr.bf16.mxu0 0
        %310 = vmatmul.mubr.bf16.gmra.mxu0 %v265
        %v311 = vpop.f32.mrf.mxu0
        %v312 = vadd.f32 0.0, %v311
        %v313 = vpop.f32.mrf.mxu0
        %v314 = vadd.f32 0.0, %v313
        %v315 = vpop.f32.mrf.mxu0
        %v316 = vadd.f32 0.0, %v315
        %v317 = vpop.f32.mrf.mxu0
        %v318 = vadd.f32 0.0, %v317
        %319 = vmatprep.mubr.bf16.mxu0 0
        %320 = vmatmul.mubr.bf16.gmra.mxu0 %v268
        %v321 = vpop.f32.mrf.mxu0
        %v322 = vadd.f32 0.0, %v321
        %v323 = vpop.f32.mrf.mxu0
        %v324 = vadd.f32 0.0, %v323
        %v325 = vpop.f32.mrf.mxu0
        %v326 = vadd.f32 0.0, %v325
        %v327 = vpop.f32.mrf.mxu0
        %v328 = vadd.f32 0.0, %v327
        %329 = vdwg.mxu0
        %v330 = vmax.f32 %v312, %v322
        %v331 = vmax.f32 %v316, %v326
        %v332 = vmax.f32 %v330, %v331
        %v333 = vrot.slane %v332, 4
        %v334 = vmax.f32 %v332, %v333
        %v335 = vrot.slane %v334, 2
        %v336 = vmax.f32 %v334, %v335
        %v337 = vrot.slane %v336, 1
        %v338 = vmax.f32 %v336, %v337
        %v339 = vmax.f32 %v314, %v324
        %v340 = vmax.f32 %v318, %v328
        %v341 = vmax.f32 %v339, %v340
        %v342 = vrot.slane %v341, 4
        %v343 = vmax.f32 %v341, %v342
        %v344 = vrot.slane %v343, 2
        %v345 = vmax.f32 %v343, %v344
        %v346 = vrot.slane %v345, 1
        %v347 = vmax.f32 %v345, %v346
        %v348 = vsub.f32 %v312, %v338
        %v349 = vsub.f32 %v314, %v347
        %v350 = vsub.f32 %v316, %v338
        %v351 = vsub.f32 %v318, %v347
        %v352 = vsub.f32 %v322, %v338
        %v353 = vsub.f32 %v324, %v347
        %v354 = vsub.f32 %v326, %v338
        %v355 = vsub.f32 %v328, %v347
        %v356 = vmul.f32 %v348, 1.442695
        %v357 = vpow.pop %v356
        %v358 = vmul.f32 %v349, 1.442695
        %v359 = vpow.pop %v358
        %v360 = vmul.f32 %v350, 1.442695
        %v361 = vpow.pop %v360
        %v362 = vmul.f32 %v351, 1.442695
        %v363 = vpow.pop %v362
        %v364 = vmul.f32 %v352, 1.442695
        %v365 = vpow.pop %v364
        %v366 = vmul.f32 %v353, 1.442695
        %v367 = vpow.pop %v366
        %v368 = vmul.f32 %v354, 1.442695
        %v369 = vpow.pop %v368
        %v370 = vmul.f32 %v355, 1.442695
        %v371 = vpow.pop %v370
        %v372 = vadd.f32 %v357, %v361
        %v373 = vadd.f32 %v372, %v365
        %v374 = vadd.f32 %v373, %v369
        %v375 = vrot.slane %v374, 4
        %v376 = vadd.f32 %v374, %v375
        %v377 = vrot.slane %v376, 2
        %v378 = vadd.f32 %v376, %v377
        %v379 = vrot.slane %v378, 1
        %v380 = vadd.f32 %v378, %v379
        %v381 = vadd.f32 %v359, %v363
        %v382 = vadd.f32 %v381, %v367
        %v383 = vadd.f32 %v382, %v371
        %v384 = vrot.slane %v383, 4
        %v385 = vadd.f32 %v383, %v384
        %v386 = vrot.slane %v385, 2
        %v387 = vadd.f32 %v385, %v386
        %v388 = vrot.slane %v387, 1
        %v389 = vadd.f32 %v387, %v388
        %v390 = vrcp.pop %v380
        %v391 = vrcp.pop %v389
        %v392 = vmul.f32 %v357, %v390
        %v393 = vmul.f32 %v359, %v391
        %v394 = vmul.f32 %v361, %v390
        %v395 = vmul.f32 %v363, %v391
        %v396 = vmul.f32 %v365, %v390
        %v397 = vmul.f32 %v367, %v391
        %v398 = vmul.f32 %v369, %v390
        %v399 = vmul.f32 %v371, %v391
        %v400 = vlog2.pop %v380
        %v401 = vmul.f32 %v400, 0.6931472
        %v402 = vlog2.pop %v389
        %v403 = vmul.f32 %v402, 0.6931472
        %v404 = vmul.f32 %v357, %v348
        %v405 = vmul.f32 %v359, %v349
        %v406 = vmul.f32 %v361, %v350
        %v407 = vmul.f32 %v363, %v351
        %v408 = vmul.f32 %v365, %v352
        %v409 = vmul.f32 %v367, %v353
        %v410 = vmul.f32 %v369, %v354
        %v411 = vmul.f32 %v371, %v355
        %v412 = vadd.f32 %v404, %v406
        %v413 = vadd.f32 %v412, %v408
        %v414 = vadd.f32 %v413, %v410
        %v415 = vrot.slane %v414, 4
        %v416 = vadd.f32 %v414, %v415
        %v417 = vrot.slane %v416, 2
        %v418 = vadd.f32 %v416, %v417
        %v419 = vrot.slane %v418, 1
        %v420 = vadd.f32 %v418, %v419
        %v421 = vadd.f32 %v405, %v407
        %v422 = vadd.f32 %v421, %v409
        %v423 = vadd.f32 %v422, %v411
        %v424 = vrot.slane %v423, 4
        %v425 = vadd.f32 %v423, %v424
        %v426 = vrot.slane %v425, 2
        %v427 = vadd.f32 %v425, %v426
        %v428 = vrot.slane %v427, 1
        %v429 = vadd.f32 %v427, %v428
        %v430 = vmul.f32 %v420, %v390
        %v431 = vmul.f32 %v429, %v391
        %v432 = vsub.f32 %v401, %v430
        %v433 = vsub.f32 %v403, %v431
        %v434 = vld [vmem:[#allocation7] sm:$0xf]
        %v435 = vpack.c.bf16 %v394, %v392
        %v436 = vpack.c.bf16 %v395, %v393
        %v437 = vpack.c.bf16 %v398, %v396
        %v438 = vpack.c.bf16 %v399, %v397
        %vm439 = vcmask 261120
        %v441 = vsel %vm439, %v434, 0
        %443 = vmatprep.subr.bf16.mxu0 0
        %444 = vmatpush1.bf16.msra.mxu0 0
        %445 = vmatprep.subr.bf16.mxu0 0
        %446 = vmatpush1.bf16.msra.mxu0 0
        %447 = vmatprep.subr.bf16.mxu0 0
        %448 = vmatpush1.bf16.msra.mxu0 0
        %449 = vmatprep.subr.bf16.mxu0 0
        %450 = vmatpush1.bf16.msra.mxu0 0
        %451 = vmatprep.subr.bf16.mxu0 0
        %452 = vmatpush1.bf16.msra.mxu0 0
        %453 = vmatprep.subr.bf16.mxu0 0
        %454 = vmatpush1.bf16.msra.mxu0 0
        %455 = vmatprep.subr.bf16.mxu0 %v438
        %456 = vmatpush1.bf16.msra.mxu0 %v437
        %457 = vmatprep.subr.bf16.mxu0 %v436
        %458 = vmatpush1.bf16.msra.mxu0 %v435
        %459 = vmatprep.subr.bf16.mxu0 0
        %460 = vmatpush2.bf16.msra.mxu0 0
        %461 = vmatprep.subr.bf16.mxu0 0
        %462 = vmatpush2.bf16.msra.mxu0 0
        %463 = vmatprep.subr.bf16.mxu0 0
        %464 = vmatpush2.bf16.msra.mxu0 0
        %465 = vmatprep.subr.bf16.mxu0 0
        %466 = vmatpush2.bf16.msra.mxu0 0
        %467 = vmatprep.subr.bf16.mxu0 0
        %468 = vmatpush2.bf16.msra.mxu0 0
        %469 = vmatprep.subr.bf16.mxu0 0
        %470 = vmatpush2.bf16.msra.mxu0 0
        %471 = vmatprep.subr.bf16.mxu0 0
        %472 = vmatpush2.bf16.msra.mxu0 0
        %473 = vmatprep.subr.bf16.mxu0 0
        %474 = vmatpush2.bf16.msra.mxu0 0
        %475 = vmatprep.mubr.bf16.mxu0 0
        %476 = vmatmul.mubr.bf16.gmra.mxu0 %v441
        %v477 = vpop.f32.mrf.mxu0
        %v478 = vadd.f32 0.0, %v477
        %v479 = vpop.f32.mrf.mxu0
        %v480 = vadd.f32 0.0, %v479
        %v481 = vpop.f32.mrf.mxu0
        %v482 = vpop.f32.mrf.mxu0
        %483 = vdwg.mxu0
        %484 = vst [vmem:[%s215] sm:$0xff] %v478
        %485 = vst [vmem:[%s215 + $0x8] sm:$0xff] %v480
        %v488 = vcombine.low %v432, %v433
        %v490 = vunpack.c.l.s4 1966171168
        %v491 = vunpack.c.0.s8 %v490
        %v492 = vlaneseq
        %v493 = vshrl.u32 %v492, 7
        %v494 = vsub.s32 %v491, %v493
        %v495 = vrot.slane %v488, %v494
        %v497 = vunpack.c.l.s4 1966171168
        %v498 = vunpack.c.0.s8 %v497
        %v499 = vlaneseq
        %v500 = vshrl.u32 %v499, 7
        %v501 = vsub.s32 %v498, %v500
        %v502 = vrot.slane %v495, %v501
        %v504 = vlaneseq
        %vm505 = vcmp.ge.s32.totalorder %v504, 0
        %vm506 = vcmp.lt.s32.totalorder %v504, 256
        %vm507 = vmand %vm505, %vm506
        %s508 = scalar_lea.vmem %s215, 16 [#allocation8]
        %509 = vst.msk [vmem:[%s508] ss:$8 sm:$0x3] %vm507, %v502
        %510 = vst.msk [vmem:[%s508] ss:$8 sm:$0x0] %vm507, %v502
        %s511 = sand.u32 %s97, 1
        %s512 = scalar_lea.sflag [#allocation4], %s511
        %s513 = sand.u32 %s97, 1
        %s514 = smul.addr %s513, 32
        %s515 = scalar_lea.vmem [#allocation8], %s514
        // Predicated region
        $region45: #{tpu_custom_call.1} parent=31 // pred_check
          %p516 = pneg %p107
        $region46: #{tpu_custom_call.1} parent=31 // pred_check_branch
          %518 = sbr.rel (%p516) target = $region48
        $region47: #{tpu_custom_call.1} parent=31 // pred_region
          %s519 = smul.u32 2, %s21
          %s521 = ssub.s32 512, 512
          %522 = vsyncadd %s512, %s521
          %s523 = smul.addr %s519, 128
          %s524 = scalar_lea.hbm %s3, %s523
          %s525 = sshll.u32 %s515, 4
          %s526 = int_to_ptr.vmem [resolvable:$true] %s525
          %531 = dma.vmem_to_hbm [thread:$0]  %s526, 512, %s524, %s512, 256, 512, 16
        $region48: #{tpu_custom_call.1} parent=31 // pred_fallthru
          _
      $region32: #{tpu_custom_call.1} parent=5 // pred_fallthru
        _
      %p532 = scmp.le.s32.totalorder 2, %s16
      // Predicated region
      $region49: #{tpu_custom_call.1} parent=5 // pred_check
        %p533 = pneg %p532
      $region50: #{tpu_custom_call.1} parent=5 // pred_check_branch
        %535 = sbr.rel (%p533) target = $region52
      $region51: #{tpu_custom_call.1} parent=5 // pred_region
        %s536 = ssub.s32 %s16, 2
        // Predicated region
        $region53: #{tpu_custom_call.1} parent=51 // pred_check
          %p537 = pneg %p113
        $region54: #{tpu_custom_call.1} parent=51 // pred_check_branch
          %539 = sbr.rel (%p537) target = $region56
        $region55: #{tpu_custom_call.1} parent=51 // pred_region
          %s540 = sand.u32 %s98, 1
          %s541 = scalar_lea.sflag [#allocation4], %s540
          %s542 = sand.u32 %s98, 1
          %s543 = smul.addr %s542, 32
          %s544 = scalar_lea.vmem [#allocation8], %s543
          %545 = dma.done %s541, 512
        $region56: #{tpu_custom_call.1} parent=51 // pred_fallthru
          _
      $region52: #{tpu_custom_call.1} parent=5 // pred_fallthru
        _
    $region6: #{tpu_custom_call.1} parent=1 // loop_footer
      %s20 = sadd.s32 1, %s16
    $region7: #{tpu_custom_call.1} parent=1 // loop_footer_branch
      %15 = sbr.rel target = $region3
    $region8: #{tpu_custom_call.1} parent=1 // loop_exit
      _
    %546 = vsyncpa [#allocation3], 1
    %s547 = scalar_lea.sflag [#allocation3], 1
    %548 = vsyncpa %s547, 1
    %549 = vsyncpa [#allocation6], 1
    %550 = vsyncpa [#allocation4], 1
    %s551 = scalar_lea.sflag [#allocation4], 1
    %552 = vsyncpa %s551, 1

</llo_original>
